<compile_context>
chip_gen: v7x
topology: tpu7x:2x2x1
jax: 0.10.0
libtpu: 0.0.40
codegen_flags: <defaults>
</compile_context>

<pallas_src>
import functools

import jax
import jax.numpy as jnp
from jax.experimental import pallas as pl
from jax.experimental.pallas import tpu as pltpu

LANE = 128
SUBLANE = 8
NEG_BIG = -1e30  # finite "-inf": padded label lanes never produce NaNs


def _round_up(x, m):
    return (x + m - 1) // m * m


def cls_head_kernel(cls_ref, w_ref, b_ref, out_ref, *, fuse_layernorm):
    """Fused [optional CLS layernorm] -> Linear(768, L) -> LogSoftmax(dim=1).

    cls_ref: (TB, H)  bf16 CLS embedding rows
    w_ref:   (H, Lp)  bf16 classifier weight, zero-padded to Lp >= 128 lanes
    b_ref:   (1, Lp)  f32 classifier bias; padded lanes hold -1e30 so they are
                      masked out of the log-softmax for free
    out_ref: (TB, Lp) f32 log-probabilities (padded lanes garbage, sliced off)
    """
    x = cls_ref[...].astype(jnp.float32)                         # (TB, H) f32

    if fuse_layernorm:
        # Single-pass stats: var = E[x^2] - mean^2. Only for the synthetic
        # encoder stand-in; disable for a real pretrained BERT (its output is
        # already layernormed -> would double-normalize).
        inv_h = 1.0 / x.shape[-1]
        mu = jnp.sum(x, axis=-1, keepdims=True) * inv_h
        ex2 = jnp.sum(x * x, axis=-1, keepdims=True) * inv_h
        var = ex2 - mu * mu
        x = (x - mu) * jax.lax.rsqrt(var + 1e-12)                # EUP rsqrt

    # DenseClassifier1: bf16 MXU matmul with f32 accumulation. The -1e30 bias
    # on padded lanes doubles as the label mask (weight padding is zero).
    logits = jnp.dot(x.astype(jnp.bfloat16), w_ref[...],
                     preferred_element_type=jnp.float32) + b_ref[...]

    # Dropout(0.1) -> identity at inference.
    # TODO(synk): training-mode dropout (random mask + 1/(1-p) scale) not
    # reproduced; inference semantics (identity) implemented.

    # LogSoftmax over dim=1; padded lanes underflow to 0 in exp().
    m = jnp.max(logits, axis=1, keepdims=True)                   # (TB, 1)
    shifted = logits - m
    lse = jnp.log(jnp.sum(jnp.exp(shifted), axis=1, keepdims=True))
    out_ref[...] = shifted - lse


def prepare_head_params(w_cls, b_cls):
    """One-time prep of DenseClassifier1 params (hoisted off the fwd path).

    w_cls: (L, 768) torch nn.Linear weight layout; b_cls: (L,) bias.
    Returns (w_pad (768, Lp) bf16, b_pad (1, Lp) f32 with -1e30 mask padding).
    """
    L, H = w_cls.shape
    Lp = _round_up(max(L, LANE), LANE)        # lane-dense output, >= 128 lanes
    w_pad = jnp.zeros((H, Lp), jnp.bfloat16).at[:, :L].set(
        w_cls.T.astype(jnp.bfloat16))
    b_pad = jnp.full((1, Lp), NEG_BIG, jnp.float32).at[0, :L].set(
        b_cls.astype(jnp.float32))
    return w_pad, b_pad


def _pick_batch_tile(B):
    """Large tiles to amortize per-step overhead (~0.35us), but keep >= 2 grid
    steps once the batch is non-trivial so both v7x TensorCores get work."""
    if B <= SUBLANE:
        return B                                   # single full-array tile
    return min(512, _round_up(pl.cdiv(B, 2), SUBLANE))


def bert_arch_head(cls_act, w_pad, b_pad, num_labels, *, fuse_layernorm=False):
    """Pallas head: [LN] -> Linear(768, L) -> Dropout(id) -> LogSoftmax.

    cls_act: (B, 768) CLS-row activations (any float dtype; cast to bf16)
    w_pad/b_pad: outputs of prepare_head_params
    returns: (B, num_labels) f32 log-probabilities
    """
    B, H = cls_act.shape
    Lp = w_pad.shape[1]
    if cls_act.dtype != jnp.bfloat16:
        cls_act = cls_act.astype(jnp.bfloat16)

    TB = _pick_batch_tile(B)
    grid = pl.cdiv(B, TB)

    cost = pl.CostEstimate(
        flops=2 * B * H * Lp + 6 * B * H,
        transcendentals=B * Lp + 2 * B,
        bytes_accessed=B * H * 2 + H * Lp * 2 + Lp * 4 + B * Lp * 4,
    )

    grid_spec = pltpu.PrefetchScalarGridSpec(
        num_scalar_prefetch=0,
        grid=(grid,),
        in_specs=[
            pl.BlockSpec((TB, H), lambda i: (i, 0)),    # bf16 CLS rows
            pl.BlockSpec((H, Lp), lambda i: (0, 0)),    # weight, resident
            pl.BlockSpec((1, Lp), lambda i: (0, 0)),    # bias, resident
        ],
        out_specs=pl.BlockSpec((TB, Lp), lambda i: (i, 0)),
    )

    out = pl.pallas_call(
        functools.partial(cls_head_kernel, fuse_layernorm=fuse_layernorm),
        out_shape=jax.ShapeDtypeStruct((B, Lp), jnp.float32),
        grid_spec=grid_spec,
        compiler_params=pltpu.CompilerParams(
            dimension_semantics=("parallel",)),
        cost_estimate=cost,
    )(cls_act, w_pad, b_pad)

    return out[:, :num_labels]


# ----------------------------------------------------------------------------
# Synthetic stand-in for the external pretrained BERT encoder (plain-JAX glue).
# ----------------------------------------------------------------------------
def synthetic_bert_last_hidden(sent_id, mask, tok_emb, pos_emb):
    """Full (B, S, 768) last hidden state -- used only for the reference."""
    h = tok_emb[sent_id] + pos_emb[None, : sent_id.shape[1], :]
    h = h * mask[..., None].astype(h.dtype)        # toy semantics, not real BERT
    mu = jnp.mean(h, axis=-1, keepdims=True)
    var = jnp.var(h, axis=-1, keepdims=True)
    return (h - mu) / jnp.sqrt(var + 1e-12)


def synthetic_bert_cls_raw(sent_id, mask, tok_emb, pos_emb):
    """Pre-layernorm CLS row only (B, 768), emitted in bf16 straight from the
    encoder so the kernel's input DMA is half-width; the layernorm itself is
    fused into the Pallas kernel epilogue (fuse_layernorm=True)."""
    h = tok_emb[sent_id[:, 0]] + pos_emb[0][None, :]
    h = h * mask[:, 0:1].astype(h.dtype)
    return h.astype(jnp.bfloat16)


if __name__ == "__main__":
    B, S, H = 2, 8, 768          # batch, seq len, BERT hidden size (fixed 768)
    NUM_LABELS = 5
    VOCAB = 50

    key = jax.random.PRNGKey(0)
    k_ids, k_tok, k_pos, k_w, k_b = jax.random.split(key, 5)

    # Inputs consistent with forward(sent_id, mask)
    sent_id = jax.random.randint(k_ids, (B, S), 0, VOCAB, dtype=jnp.int32)
    mask = jnp.ones((B, S), dtype=jnp.int32)

    # Deterministic synthetic parameters.
    tok_emb = jax.random.normal(k_tok, (VOCAB, H), dtype=jnp.float32) * 0.02
    pos_emb = jax.random.normal(k_pos, (S, H), dtype=jnp.float32) * 0.02
    # DenseClassifier1: nn.Linear(768, num_labels) -> weight (L, 768), bias (L,)
    w_cls = jax.random.normal(k_w, (NUM_LABELS, H), dtype=jnp.float32) * 0.02
    b_cls = jax.random.normal(k_b, (NUM_LABELS,), dtype=jnp.float32) * 0.02

    # One-time classifier param prep (cached at model init in real use).
    w_pad, b_pad = prepare_head_params(w_cls, b_cls)

    # Only the bf16 pre-LN CLS row goes to the kernel (no (B,S,H) traffic,
    # no wrapper-side zero-pad copy of the batch).
    cls_raw = synthetic_bert_cls_raw(sent_id, mask, tok_emb, pos_emb)

    out = bert_arch_head(cls_raw, w_pad, b_pad, NUM_LABELS,
                         fuse_layernorm=True)
    out = jax.block_until_ready(out)

    # Pure-JAX f32 reference of the module's forward semantics.
    hidden = synthetic_bert_last_hidden(sent_id, mask, tok_emb, pos_emb)
    ref = jax.nn.log_softmax(hidden[:, 0, :] @ w_cls.T + b_cls, axis=1)

    assert out.shape == (B, NUM_LABELS)
    # Tolerance vs f32 reference: kernel takes bf16 activations + bf16 weights
    # on the MXU with f32 accumulation (observed error ~few e-3 here).
    assert jnp.allclose(out, ref, atol=3e-2, rtol=3e-2), (
        float(jnp.max(jnp.abs(out - ref))))
    # Log-probabilities of the real labels must normalize (f32 output).
    assert jnp.allclose(jnp.sum(jnp.exp(out), axis=1), 1.0, atol=1e-3)

    print("KERNEL_OK")
</pallas_src>

<mosaic_0001>
module attributes {stable_mosaic.version = 11 : i64} {
  func.func @cls_head_kernel(%arg0: i32, %arg1: memref<2x768xbf16, #tpu.memory_space<vmem>>, %arg2: memref<768x128xbf16, #tpu.memory_space<vmem>>, %arg3: memref<1x128xf32, #tpu.memory_space<vmem>>, %arg4: memref<2x128xf32, #tpu.memory_space<vmem>>) attributes {dimension_semantics = [#tpu.dimension_semantics<parallel>], iteration_bounds = array<i64: 1>, scalar_prefetch = 0 : i64, scratch_operands = 0 : i64, tpu.core_type = #tpu.core_type<tc>, window_params = [{transform_indices = @transform_0, window_bounds = array<i64: 2, 768>}, {pipeline_mode = #tpu.pipeline_mode<synchronous>, transform_indices = @transform_1, window_bounds = array<i64: 768, 128>}, {pipeline_mode = #tpu.pipeline_mode<synchronous>, transform_indices = @transform_2, window_bounds = array<i64: 1, 128>}, {transform_indices = @transform_3, window_bounds = array<i64: 2, 128>}]} {
    %c0 = arith.constant 0 : index
    %c0_0 = arith.constant 0 : index
    %0 = vector.load %arg1[%c0, %c0_0] : memref<2x768xbf16, #tpu.memory_space<vmem>>, vector<2x768xbf16>
    %1 = arith.extf %0 : vector<2x768xbf16> to vector<2x768xf32>
    %cst = arith.constant dense<0.000000e+00> : vector<2xf32>
    %2 = vector.multi_reduction <add>, %1, %cst [1] : vector<2x768xf32> to vector<2xf32>
    %3 = vector.shape_cast %2 : vector<2xf32> to vector<2x1xf32>
    %cst_1 = arith.constant 0.00130208337 : f32
    %4 = vector.broadcast %cst_1 : f32 to vector<2x1xf32>
    %5 = arith.mulf %3, %4 : vector<2x1xf32>
    %6 = arith.mulf %1, %1 : vector<2x768xf32>
    %cst_2 = arith.constant dense<0.000000e+00> : vector<2xf32>
    %7 = vector.multi_reduction <add>, %6, %cst_2 [1] : vector<2x768xf32> to vector<2xf32>
    %8 = vector.shape_cast %7 : vector<2xf32> to vector<2x1xf32>
    %cst_3 = arith.constant 0.00130208337 : f32
    %9 = vector.broadcast %cst_3 : f32 to vector<2x1xf32>
    %10 = arith.mulf %8, %9 : vector<2x1xf32>
    %11 = arith.mulf %5, %5 : vector<2x1xf32>
    %12 = arith.subf %10, %11 : vector<2x1xf32>
    %13 = vector.broadcast %5 : vector<2x1xf32> to vector<2x768xf32>
    %14 = arith.subf %1, %13 : vector<2x768xf32>
    %cst_4 = arith.constant 9.99999996E-13 : f32
    %15 = vector.broadcast %cst_4 : f32 to vector<2x1xf32>
    %16 = arith.addf %12, %15 : vector<2x1xf32>
    %17 = math.rsqrt %16 : vector<2x1xf32>
    %18 = vector.broadcast %17 : vector<2x1xf32> to vector<2x768xf32>
    %19 = arith.mulf %14, %18 : vector<2x768xf32>
    %20 = arith.truncf %19 : vector<2x768xf32> to vector<2x768xbf16>
    %c0_5 = arith.constant 0 : index
    %c0_6 = arith.constant 0 : index
    %21 = vector.load %arg2[%c0_5, %c0_6] : memref<768x128xbf16, #tpu.memory_space<vmem>>, vector<768x128xbf16>
    %cst_7 = arith.constant dense<0.000000e+00> : vector<2x128xf32>
    %22 = tpu.matmul %20, %21, %cst_7 {dimension_numbers = #tpu.dot_dimension_numbers<[1], [0], [0], [1], [0, 0, 1, 1], [], []>} : vector<2x768xbf16>, vector<768x128xbf16>, vector<2x128xf32> -> vector<2x128xf32>
    %c0_8 = arith.constant 0 : index
    %c0_9 = arith.constant 0 : index
    %23 = vector.load %arg3[%c0_8, %c0_9] : memref<1x128xf32, #tpu.memory_space<vmem>>, vector<1x128xf32>
    %24 = vector.broadcast %23 : vector<1x128xf32> to vector<2x128xf32>
    %25 = arith.addf %22, %24 : vector<2x128xf32>
    %cst_10 = arith.constant dense<0xFF800000> : vector<2xf32>
    %26 = vector.multi_reduction <maximumf>, %25, %cst_10 [1] : vector<2x128xf32> to vector<2xf32>
    %27 = vector.shape_cast %26 : vector<2xf32> to vector<2x1xf32>
    %28 = vector.broadcast %27 : vector<2x1xf32> to vector<2x128xf32>
    %29 = arith.subf %25, %28 : vector<2x128xf32>
    %30 = math.exp %29 : vector<2x128xf32>
    %cst_11 = arith.constant dense<0.000000e+00> : vector<2xf32>
    %31 = vector.multi_reduction <add>, %30, %cst_11 [1] : vector<2x128xf32> to vector<2xf32>
    %32 = vector.shape_cast %31 : vector<2xf32> to vector<2x1xf32>
    %33 = math.log %32 : vector<2x1xf32>
    %34 = vector.broadcast %33 : vector<2x1xf32> to vector<2x128xf32>
    %35 = arith.subf %29, %34 : vector<2x128xf32>
    %c0_12 = arith.constant 0 : index
    %c0_13 = arith.constant 0 : index
    %36 = vector.load %arg4[%c0_12, %c0_13] : memref<2x128xf32, #tpu.memory_space<vmem>>, vector<2x128xf32>
    tpu.vector_store %arg4[%c0_12, %c0_13], %35 {strides = array<i32>} : memref<2x128xf32, #tpu.memory_space<vmem>>, vector<2x128xf32>,
    return
  }
  func.func @transform_0(%arg0: i32) -> (i32, i32) {
    %c0_i32 = arith.constant 0 : i32
    %c0_i32_0 = arith.constant 0 : i32
    return %arg0, %c0_i32 : i32, i32
  }
  func.func @transform_1(%arg0: i32) -> (i32, i32) {
    %c0_i32 = arith.constant 0 : i32
    %c0_i32_0 = arith.constant 0 : i32
    %c0_i32_1 = arith.constant 0 : i32
    return %c0_i32, %c0_i32_0 : i32, i32
  }
  func.func @transform_2(%arg0: i32) -> (i32, i32) {
    %c0_i32 = arith.constant 0 : i32
    %c0_i32_0 = arith.constant 0 : i32
    %c0_i32_1 = arith.constant 0 : i32
    return %c0_i32, %c0_i32_0 : i32, i32
  }
  func.func @transform_3(%arg0: i32) -> (i32, i32) {
    %c0_i32 = arith.constant 0 : i32
    %c0_i32_0 = arith.constant 0 : i32
    return %arg0, %c0_i32 : i32, i32
  }
}

</mosaic_0001>

<llo_original>
// kernel: tpu_custom_call.1
$region0: #{tpu_custom_call.1}
  #allocation0 [shape = 'u32[]', space=smem, size = 0x4, offset = 0x4, fixed_abs, tag = 'smem constant byte address 0x4 - core index']
  #allocation1 [shape = 'u32[144,128]{1,0:T(1,128)}', space=vmem, size = 0x12000, scoped, tag = 'internal scratch']
  %s0 = inlined_call_operand.hbm [shape: bf16[2,768], index: 0, kind: input, shape index: {}]
  %s1 = inlined_call_operand.hbm [shape: bf16[768,128], index: 1, kind: input, shape index: {}]
  %s2 = inlined_call_operand.vmem [shape: f32[1,128], index: 2, kind: input, shape index: {}]
  %s3 = inlined_call_operand.hbm [shape: f32[2,128], index: 3, kind: output, shape index: {}]
  %s4 = sld [smem:[#allocation0]]
  $region30: #{tpu_custom_call.1} parent=0
    _
  %s6 = ssub.s32 1, %s4
  %s7 = scalar_select 0, %s6, %s4
  $region1: #{tpu_custom_call.1} parent=0
    #allocation2 [shape = 'u8[3072]{0}', space=vmem, size = 0xc00, scoped, tag = 'input window, operand 0, single buffered']
    #allocation3 [shape = 's32[1]{0}', space=sflag, size = 0x4, scoped, tag = 'scoped memory for tpu_custom_call.1']
    #allocation4 [shape = 's32[1]{0}', space=sflag, size = 0x4, scoped, tag = 'scoped memory for tpu_custom_call.1']
    #allocation5 [shape = 'u8[196608]{0}', space=vmem, size = 0x30000, scoped, tag = 'input window, operand 1, single buffered']
    #allocation6 [shape = 's32[1]{0}', space=sflag, size = 0x4, scoped, tag = 'scoped memory for tpu_custom_call.1']
    #allocation7 [shape = 'u8[1024]{0}', space=vmem, size = 0x400, scoped, tag = 'output window, operand 0, single buffered']
    %8 = vsyncpa [#allocation3], 0
    %9 = vsyncpa [#allocation6], 0
    %10 = vsyncpa [#allocation4], 0
    // Predicated region
    $region2: #{tpu_custom_call.1} parent=1 // pred_check
      _
    $region3: #{tpu_custom_call.1} parent=1 // pred_check_branch
      %12 = sbr.rel (0) target = $region5
    $region4: #{tpu_custom_call.1} parent=1 // pred_region
      %s14 = ssub.s32 96, 96
      %15 = vsyncadd [#allocation3], %s14
      %s17 = sshll.u32 [#allocation2], 4
      %s18 = int_to_ptr.vmem [resolvable:$true] %s17
      %20 = dma.hbm_to_vmem [thread:$0]  %s0, 96, %s18, [#allocation3]
    $region5: #{tpu_custom_call.1} parent=1 // pred_fallthru
      _
    // Predicated region
    $region6: #{tpu_custom_call.1} parent=1 // pred_check
      _
    $region7: #{tpu_custom_call.1} parent=1 // pred_check_branch
      %22 = sbr.rel (0) target = $region9
    $region8: #{tpu_custom_call.1} parent=1 // pred_region
      %s24 = ssub.s32 6144, 6144
      %25 = vsyncadd [#allocation6], %s24
      %s26 = sshll.u32 [#allocation5], 4
      %s27 = int_to_ptr.vmem [resolvable:$true] %s26
      %32 = dma.hbm_to_vmem [thread:$0]  %s1, 6144, %s27, [#allocation6], 64, 64, 4
    $region9: #{tpu_custom_call.1} parent=1 // pred_fallthru
      _
    // Predicated region
    $region10: #{tpu_custom_call.1} parent=1 // pred_check
      _
    $region11: #{tpu_custom_call.1} parent=1 // pred_check_branch
      %34 = sbr.rel (0) target = $region13
    $region12: #{tpu_custom_call.1} parent=1 // pred_region
      _
    $region13: #{tpu_custom_call.1} parent=1 // pred_fallthru
      _
    // Predicated region
    $region14: #{tpu_custom_call.1} parent=1 // pred_check
      _
    $region15: #{tpu_custom_call.1} parent=1 // pred_check_branch
      %36 = sbr.rel (0) target = $region17
    $region16: #{tpu_custom_call.1} parent=1 // pred_region
      %37 = dma.done [#allocation3], 96
    $region17: #{tpu_custom_call.1} parent=1 // pred_fallthru
      _
    // Predicated region
    $region18: #{tpu_custom_call.1} parent=1 // pred_check
      _
    $region19: #{tpu_custom_call.1} parent=1 // pred_check_branch
      %39 = sbr.rel (0) target = $region21
    $region20: #{tpu_custom_call.1} parent=1 // pred_region
      %40 = dma.done [#allocation6], 6144
    $region21: #{tpu_custom_call.1} parent=1 // pred_fallthru
      _
    %v42 = vld [vmem:[#allocation2] sm:$0x3f]
    %v43 = vunpack.c.l.bf16 %v42
    %v44 = vunpack.c.h.bf16 %v42
    %v47 = vcombine.high %v43, %v43
    %v49 = vunpack.c.l.s4 1983009808
    %v50 = vunpack.c.0.s8 %v49
    %v51 = vlaneseq
    %v52 = vshrl.u32 %v51, 7
    %v53 = vsub.s32 %v50, %v52
    %v54 = vrot.slane %v43, %v53
    %v56 = vunpack.c.l.s4 1983009808
    %v57 = vunpack.c.0.s8 %v56
    %v58 = vlaneseq
    %v59 = vshrl.u32 %v58, 7
    %v60 = vsub.s32 %v57, %v59
    %v61 = vrot.slane %v47, %v60
    %v62 = vcombine.high %v54, %v54
    %v63 = vcombine.high %v61, %v61
    %v65 = vunpack.c.l.s4 1983009808
    %v66 = vunpack.c.0.s8 %v65
    %v67 = vlaneseq
    %v68 = vshrl.u32 %v67, 7
    %v69 = vsub.s32 %v66, %v68
    %v70 = vrot.slane %v44, %v69
    %v71 = vcombine.high %v70, %v70
    %vm78 = vcmask 1041408
    %v79 = vsel %vm78, %v54, 0.0
    %v80 = vsel %vm78, %v62, 0.0
    %v81 = vadd.f32 %v79, %v80
    %v82 = vsel %vm78, %v61, 0.0
    %v83 = vadd.f32 %v81, %v82
    %v84 = vsel %vm78, %v63, 0.0
    %v85 = vadd.f32 %v83, %v84
    %v86 = vsel %vm78, %v70, 0.0
    %v87 = vadd.f32 %v85, %v86
    %v88 = vsel %vm78, %v71, 0.0
    %v89 = vadd.f32 %v87, %v88
    %90 = vadd.xlane.f32.xlu0 %v89
    %v91 = vpop.xlane.xlu0 %90
    %v92 = vmul.f32 %v91, 0.0013020834
    %v93 = vmul.f32 %v43, %v43
    %v94 = vmul.f32 %v44, %v44
    %v97 = vcombine.high %v93, %v93
    %v99 = vunpack.c.l.s4 1983009808
    %v100 = vunpack.c.0.s8 %v99
    %v101 = vlaneseq
    %v102 = vshrl.u32 %v101, 7
    %v103 = vsub.s32 %v100, %v102
    %v104 = vrot.slane %v93, %v103
    %v106 = vunpack.c.l.s4 1983009808
    %v107 = vunpack.c.0.s8 %v106
    %v108 = vlaneseq
    %v109 = vshrl.u32 %v108, 7
    %v110 = vsub.s32 %v107, %v109
    %v111 = vrot.slane %v97, %v110
    %v112 = vcombine.high %v104, %v104
    %v113 = vcombine.high %v111, %v111
    %v115 = vunpack.c.l.s4 1983009808
    %v116 = vunpack.c.0.s8 %v115
    %v117 = vlaneseq
    %v118 = vshrl.u32 %v117, 7
    %v119 = vsub.s32 %v116, %v118
    %v120 = vrot.slane %v94, %v119
    %v121 = vcombine.high %v120, %v120
    %v128 = vsel %vm78, %v104, 0.0
    %v129 = vsel %vm78, %v112, 0.0
    %v130 = vadd.f32 %v128, %v129
    %v131 = vsel %vm78, %v111, 0.0
    %v132 = vadd.f32 %v130, %v131
    %v133 = vsel %vm78, %v113, 0.0
    %v134 = vadd.f32 %v132, %v133
    %v135 = vsel %vm78, %v120, 0.0
    %v136 = vadd.f32 %v134, %v135
    %v137 = vsel %vm78, %v121, 0.0
    %v138 = vadd.f32 %v136, %v137
    %139 = vadd.xlane.f32.xlu0 %v138
    %v140 = vpop.xlane.xlu0 %139
    %v141 = vmul.f32 %v140, 0.0013020834
    %v142 = vmul.f32 %v92, %v92
    %v143 = vsub.f32 %v141, %v142
    %v146 = vunpack.c.l.s4 269488144
    %v147 = vunpack.c.0.s8 %v146
    %v148 = vlaneseq
    %v149 = vshrl.u32 %v148, 7
    %v150 = vsub.s32 %v147, %v149
    %v151 = vrot.slane %v92, %v150
    %v153 = vsub.f32 %v43, %v151
    %v154 = vsub.f32 %v44, %v151
    %v155 = vadd.f32 %v143, 1e-12
    %v156 = vrsqrt.pop %v155
    %v159 = vunpack.c.l.s4 269488144
    %v160 = vunpack.c.0.s8 %v159
    %v161 = vlaneseq
    %v162 = vshrl.u32 %v161, 7
    %v163 = vsub.s32 %v160, %v162
    %v164 = vrot.slane %v156, %v163
    %v166 = vmul.f32 %v153, %v164
    %v167 = vmul.f32 %v154, %v164
    %v170 = vcombine.high %v166, %v166
    %v172 = vunpack.c.l.s4 1983009808
    %v173 = vunpack.c.0.s8 %v172
    %v174 = vlaneseq
    %v175 = vshrl.u32 %v174, 7
    %v176 = vsub.s32 %v173, %v175
    %v177 = vrot.slane %v166, %v176
    %v179 = vunpack.c.l.s4 1983009808
    %v180 = vunpack.c.0.s8 %v179
    %v181 = vlaneseq
    %v182 = vshrl.u32 %v181, 7
    %v183 = vsub.s32 %v180, %v182
    %v184 = vrot.slane %v170, %v183
    %v185 = vcombine.high %v177, %v177
    %v186 = vcombine.high %v184, %v184
    %v188 = vunpack.c.l.s4 1983009808
    %v189 = vunpack.c.0.s8 %v188
    %v190 = vlaneseq
    %v191 = vshrl.u32 %v190, 7
    %v192 = vsub.s32 %v189, %v191
    %v193 = vrot.slane %v167, %v192
    %v194 = vcombine.high %v193, %v193
    %v201 = vpack.c.bf16 %v177, %v177
    %v202 = vpack.c.bf16 %v185, %v185
    %v203 = vpack.c.bf16 %v184, %v184
    %v204 = vpack.c.bf16 %v186, %v186
    %v205 = vpack.c.bf16 %v193, %v193
    %v206 = vpack.c.bf16 %v194, %v194
    %v207 = vld [vmem:[#allocation5] sm:$0xf]
    %v208 = vld [vmem:[#allocation5 + $0x4] sm:$0xf]
    %v209 = vld [vmem:[#allocation5 + $0x8] sm:$0xf]
    %v210 = vld [vmem:[#allocation5 + $0xc] sm:$0xf]
    %v211 = vld [vmem:[#allocation5 + $0x10] sm:$0xf]
    %v212 = vld [vmem:[#allocation5 + $0x14] sm:$0xf]
    %v213 = vld [vmem:[#allocation5 + $0x18] sm:$0xf]
    %v214 = vld [vmem:[#allocation5 + $0x1c] sm:$0xf]
    %v215 = vld [vmem:[#allocation5 + $0x20] sm:$0xf]
    %v216 = vld [vmem:[#allocation5 + $0x24] sm:$0xf]
    %v217 = vld [vmem:[#allocation5 + $0x28] sm:$0xf]
    %v218 = vld [vmem:[#allocation5 + $0x2c] sm:$0xf]
    %v219 = vld [vmem:[#allocation5 + $0x30] sm:$0xf]
    %v220 = vld [vmem:[#allocation5 + $0x34] sm:$0xf]
    %v221 = vld [vmem:[#allocation5 + $0x38] sm:$0xf]
    %v222 = vld [vmem:[#allocation5 + $0x3c] sm:$0xf]
    %v223 = vld [vmem:[#allocation5 + $0x40] sm:$0xf]
    %v224 = vld [vmem:[#allocation5 + $0x44] sm:$0xf]
    %v225 = vld [vmem:[#allocation5 + $0x48] sm:$0xf]
    %v226 = vld [vmem:[#allocation5 + $0x4c] sm:$0xf]
    %v227 = vld [vmem:[#allocation5 + $0x50] sm:$0xf]
    %v228 = vld [vmem:[#allocation5 + $0x54] sm:$0xf]
    %v229 = vld [vmem:[#allocation5 + $0x58] sm:$0xf]
    %v230 = vld [vmem:[#allocation5 + $0x5c] sm:$0xf]
    %v231 = vld [vmem:[#allocation5 + $0x60] sm:$0xf]
    %v232 = vld [vmem:[#allocation5 + $0x64] sm:$0xf]
    %v233 = vld [vmem:[#allocation5 + $0x68] sm:$0xf]
    %v234 = vld [vmem:[#allocation5 + $0x6c] sm:$0xf]
    %v235 = vld [vmem:[#allocation5 + $0x70] sm:$0xf]
    %v236 = vld [vmem:[#allocation5 + $0x74] sm:$0xf]
    %v237 = vld [vmem:[#allocation5 + $0x78] sm:$0xf]
    %v238 = vld [vmem:[#allocation5 + $0x7c] sm:$0xf]
    %v239 = vld [vmem:[#allocation5 + $0x80] sm:$0xf]
    %v240 = vld [vmem:[#allocation5 + $0x84] sm:$0xf]
    %v241 = vld [vmem:[#allocation5 + $0x88] sm:$0xf]
    %v242 = vld [vmem:[#allocation5 + $0x8c] sm:$0xf]
    %v243 = vld [vmem:[#allocation5 + $0x90] sm:$0xf]
    %v244 = vld [vmem:[#allocation5 + $0x94] sm:$0xf]
    %v245 = vld [vmem:[#allocation5 + $0x98] sm:$0xf]
    %v246 = vld [vmem:[#allocation5 + $0x9c] sm:$0xf]
    %v247 = vld [vmem:[#allocation5 + $0xa0] sm:$0xf]
    %v248 = vld [vmem:[#allocation5 + $0xa4] sm:$0xf]
    %v249 = vld [vmem:[#allocation5 + $0xa8] sm:$0xf]
    %v250 = vld [vmem:[#allocation5 + $0xac] sm:$0xf]
    %v251 = vld [vmem:[#allocation5 + $0xb0] sm:$0xf]
    %v252 = vld [vmem:[#allocation5 + $0xb4] sm:$0xf]
    %v253 = vld [vmem:[#allocation5 + $0xb8] sm:$0xf]
    %v254 = vld [vmem:[#allocation5 + $0xbc] sm:$0xf]
    %v255 = vld [vmem:[#allocation5 + $0xc0] sm:$0xf]
    %v256 = vld [vmem:[#allocation5 + $0xc4] sm:$0xf]
    %v257 = vld [vmem:[#allocation5 + $0xc8] sm:$0xf]
    %v258 = vld [vmem:[#allocation5 + $0xcc] sm:$0xf]
    %v259 = vld [vmem:[#allocation5 + $0xd0] sm:$0xf]
    %v260 = vld [vmem:[#allocation5 + $0xd4] sm:$0xf]
    %v261 = vld [vmem:[#allocation5 + $0xd8] sm:$0xf]
    %v262 = vld [vmem:[#allocation5 + $0xdc] sm:$0xf]
    %v263 = vld [vmem:[#allocation5 + $0xe0] sm:$0xf]
    %v264 = vld [vmem:[#allocation5 + $0xe4] sm:$0xf]
    %v265 = vld [vmem:[#allocation5 + $0xe8] sm:$0xf]
    %v266 = vld [vmem:[#allocation5 + $0xec] sm:$0xf]
    %v267 = vld [vmem:[#allocation5 + $0xf0] sm:$0xf]
    %v268 = vld [vmem:[#allocation5 + $0xf4] sm:$0xf]
    %v269 = vld [vmem:[#allocation5 + $0xf8] sm:$0xf]
    %v270 = vld [vmem:[#allocation5 + $0xfc] sm:$0xf]
    %v271 = vld [vmem:[#allocation5 + $0x100] sm:$0xf]
    %v272 = vld [vmem:[#allocation5 + $0x104] sm:$0xf]
    %v273 = vld [vmem:[#allocation5 + $0x108] sm:$0xf]
    %v274 = vld [vmem:[#allocation5 + $0x10c] sm:$0xf]
    %v275 = vld [vmem:[#allocation5 + $0x110] sm:$0xf]
    %v276 = vld [vmem:[#allocation5 + $0x114] sm:$0xf]
    %v277 = vld [vmem:[#allocation5 + $0x118] sm:$0xf]
    %v278 = vld [vmem:[#allocation5 + $0x11c] sm:$0xf]
    %v279 = vld [vmem:[#allocation5 + $0x120] sm:$0xf]
    %v280 = vld [vmem:[#allocation5 + $0x124] sm:$0xf]
    %v281 = vld [vmem:[#allocation5 + $0x128] sm:$0xf]
    %v282 = vld [vmem:[#allocation5 + $0x12c] sm:$0xf]
    %v283 = vld [vmem:[#allocation5 + $0x130] sm:$0xf]
    %v284 = vld [vmem:[#allocation5 + $0x134] sm:$0xf]
    %v285 = vld [vmem:[#allocation5 + $0x138] sm:$0xf]
    %v286 = vld [vmem:[#allocation5 + $0x13c] sm:$0xf]
    %v287 = vld [vmem:[#allocation5 + $0x140] sm:$0xf]
    %v288 = vld [vmem:[#allocation5 + $0x144] sm:$0xf]
    %v289 = vld [vmem:[#allocation5 + $0x148] sm:$0xf]
    %v290 = vld [vmem:[#allocation5 + $0x14c] sm:$0xf]
    %v291 = vld [vmem:[#allocation5 + $0x150] sm:$0xf]
    %v292 = vld [vmem:[#allocation5 + $0x154] sm:$0xf]
    %v293 = vld [vmem:[#allocation5 + $0x158] sm:$0xf]
    %v294 = vld [vmem:[#allocation5 + $0x15c] sm:$0xf]
    %v295 = vld [vmem:[#allocation5 + $0x160] sm:$0xf]
    %v296 = vld [vmem:[#allocation5 + $0x164] sm:$0xf]
    %v297 = vld [vmem:[#allocation5 + $0x168] sm:$0xf]
    %v298 = vld [vmem:[#allocation5 + $0x16c] sm:$0xf]
    %v299 = vld [vmem:[#allocation5 + $0x170] sm:$0xf]
    %v300 = vld [vmem:[#allocation5 + $0x174] sm:$0xf]
    %v301 = vld [vmem:[#allocation5 + $0x178] sm:$0xf]
    %v302 = vld [vmem:[#allocation5 + $0x17c] sm:$0xf]
    %v303 = vld [vmem:[%s2] sm:$0x1]
    %v305 = vlaneseq
    %v306 = vshrl.u32 %v305, 7
    %v307 = vsub.s32 0, %v306
    %v308 = vrot.slane %v303, %v307
    %v406 = vunpack.c.l.b16 %v207
    %v407 = vunpack.c.l.b16 %v208
    %v408 = vunpack.c.l.b16 %v209
    %v409 = vunpack.c.l.b16 %v210
    %v410 = vunpack.c.l.b16 %v211
    %v411 = vunpack.c.l.b16 %v212
    %v412 = vunpack.c.l.b16 %v213
    %v413 = vunpack.c.l.b16 %v214
    %v414 = vunpack.c.l.b16 %v215
    %v415 = vunpack.c.l.b16 %v216
    %v416 = vunpack.c.l.b16 %v217
    %v417 = vunpack.c.l.b16 %v218
    %v418 = vunpack.c.l.b16 %v219
    %v419 = vunpack.c.l.b16 %v220
    %v420 = vunpack.c.l.b16 %v221
    %v421 = vunpack.c.l.b16 %v222
    %v422 = vunpack.c.l.b16 %v223
    %v423 = vunpack.c.l.b16 %v224
    %v424 = vunpack.c.l.b16 %v225
    %v425 = vunpack.c.l.b16 %v226
    %v426 = vunpack.c.l.b16 %v227
    %v427 = vunpack.c.l.b16 %v228
    %v428 = vunpack.c.l.b16 %v229
    %v429 = vunpack.c.l.b16 %v230
    %v430 = vunpack.c.l.b16 %v231
    %v431 = vunpack.c.l.b16 %v232
    %v432 = vunpack.c.l.b16 %v233
    %v433 = vunpack.c.l.b16 %v234
    %v434 = vunpack.c.l.b16 %v235
    %v435 = vunpack.c.l.b16 %v236
    %v436 = vunpack.c.l.b16 %v237
    %v437 = vunpack.c.l.b16 %v238
    %v438 = vunpack.c.l.b16 %v239
    %v439 = vunpack.c.l.b16 %v240
    %v440 = vunpack.c.l.b16 %v241
    %v441 = vunpack.c.l.b16 %v242
    %v442 = vunpack.c.l.b16 %v243
    %v443 = vunpack.c.l.b16 %v244
    %v444 = vunpack.c.l.b16 %v245
    %v445 = vunpack.c.l.b16 %v246
    %v446 = vunpack.c.l.b16 %v247
    %v447 = vunpack.c.l.b16 %v248
    %v448 = vunpack.c.l.b16 %v249
    %v449 = vunpack.c.l.b16 %v250
    %v450 = vunpack.c.l.b16 %v251
    %v451 = vunpack.c.l.b16 %v252
    %v452 = vunpack.c.l.b16 %v253
    %v453 = vunpack.c.l.b16 %v254
    %v454 = vunpack.c.l.b16 %v255
    %v455 = vunpack.c.l.b16 %v256
    %v456 = vunpack.c.l.b16 %v257
    %v457 = vunpack.c.l.b16 %v258
    %v458 = vunpack.c.l.b16 %v259
    %v459 = vunpack.c.l.b16 %v260
    %v460 = vunpack.c.l.b16 %v261
    %v461 = vunpack.c.l.b16 %v262
    %v462 = vunpack.c.l.b16 %v263
    %v463 = vunpack.c.l.b16 %v264
    %v464 = vunpack.c.l.b16 %v265
    %v465 = vunpack.c.l.b16 %v266
    %v466 = vunpack.c.l.b16 %v267
    %v467 = vunpack.c.l.b16 %v268
    %v468 = vunpack.c.l.b16 %v269
    %v469 = vunpack.c.l.b16 %v270
    %v470 = vunpack.c.l.b16 %v271
    %v471 = vunpack.c.l.b16 %v272
    %v472 = vunpack.c.l.b16 %v273
    %v473 = vunpack.c.l.b16 %v274
    %v474 = vunpack.c.l.b16 %v275
    %v475 = vunpack.c.l.b16 %v276
    %v476 = vunpack.c.l.b16 %v277
    %v477 = vunpack.c.l.b16 %v278
    %v478 = vunpack.c.l.b16 %v279
    %v479 = vunpack.c.l.b16 %v280
    %v480 = vunpack.c.l.b16 %v281
    %v481 = vunpack.c.l.b16 %v282
    %v482 = vunpack.c.l.b16 %v283
    %v483 = vunpack.c.l.b16 %v284
    %v484 = vunpack.c.l.b16 %v285
    %v485 = vunpack.c.l.b16 %v286
    %v486 = vunpack.c.l.b16 %v287
    %v487 = vunpack.c.l.b16 %v288
    %v488 = vunpack.c.l.b16 %v289
    %v489 = vunpack.c.l.b16 %v290
    %v490 = vunpack.c.l.b16 %v291
    %v491 = vunpack.c.l.b16 %v292
    %v492 = vunpack.c.l.b16 %v293
    %v493 = vunpack.c.l.b16 %v294
    %v494 = vunpack.c.l.b16 %v295
    %v495 = vunpack.c.l.b16 %v296
    %v496 = vunpack.c.l.b16 %v297
    %v497 = vunpack.c.l.b16 %v298
    %v498 = vunpack.c.l.b16 %v299
    %v499 = vunpack.c.l.b16 %v300
    %v500 = vunpack.c.l.b16 %v301
    %v501 = vunpack.c.l.b16 %v302
    %v502 = vpack.c.b16 %v407, %v406
    %v503 = vpack.c.b16 %v409, %v408
    %v504 = vpack.c.b16 %v411, %v410
    %v505 = vpack.c.b16 %v413, %v412
    %v506 = vpack.c.b16 %v415, %v414
    %v507 = vpack.c.b16 %v417, %v416
    %v508 = vpack.c.b16 %v419, %v418
    %v509 = vpack.c.b16 %v421, %v420
    %v510 = vpack.c.b16 %v423, %v422
    %v511 = vpack.c.b16 %v425, %v424
    %v512 = vpack.c.b16 %v427, %v426
    %v513 = vpack.c.b16 %v429, %v428
    %v514 = vpack.c.b16 %v431, %v430
    %v515 = vpack.c.b16 %v433, %v432
    %v516 = vpack.c.b16 %v435, %v434
    %v517 = vpack.c.b16 %v437, %v436
    %v518 = vpack.c.b16 %v439, %v438
    %v519 = vpack.c.b16 %v441, %v440
    %v520 = vpack.c.b16 %v443, %v442
    %v521 = vpack.c.b16 %v445, %v444
    %v522 = vpack.c.b16 %v447, %v446
    %v523 = vpack.c.b16 %v449, %v448
    %v524 = vpack.c.b16 %v451, %v450
    %v525 = vpack.c.b16 %v453, %v452
    %v526 = vpack.c.b16 %v455, %v454
    %v527 = vpack.c.b16 %v457, %v456
    %v528 = vpack.c.b16 %v459, %v458
    %v529 = vpack.c.b16 %v461, %v460
    %v530 = vpack.c.b16 %v463, %v462
    %v531 = vpack.c.b16 %v465, %v464
    %v532 = vpack.c.b16 %v467, %v466
    %v533 = vpack.c.b16 %v469, %v468
    %v534 = vpack.c.b16 %v471, %v470
    %v535 = vpack.c.b16 %v473, %v472
    %v536 = vpack.c.b16 %v475, %v474
    %v537 = vpack.c.b16 %v477, %v476
    %v538 = vpack.c.b16 %v479, %v478
    %v539 = vpack.c.b16 %v481, %v480
    %v540 = vpack.c.b16 %v483, %v482
    %v541 = vpack.c.b16 %v485, %v484
    %v542 = vpack.c.b16 %v487, %v486
    %v543 = vpack.c.b16 %v489, %v488
    %v544 = vpack.c.b16 %v491, %v490
    %v545 = vpack.c.b16 %v493, %v492
    %v546 = vpack.c.b16 %v495, %v494
    %v547 = vpack.c.b16 %v497, %v496
    %v548 = vpack.c.b16 %v499, %v498
    %v549 = vpack.c.b16 %v501, %v500
    %598 = vmatprep.subr.bf16.mxu0 0
    %599 = vmatpush1.bf16.msra.mxu0 %v502
    %600 = vmatprep.subr.bf16.mxu0 0
    %601 = vmatpush1.bf16.msra.mxu0 %v503
    %602 = vmatprep.subr.bf16.mxu0 0
    %603 = vmatpush1.bf16.msra.mxu0 %v504
    %604 = vmatprep.subr.bf16.mxu0 0
    %605 = vmatpush1.bf16.msra.mxu0 %v505
    %606 = vmatprep.subr.bf16.mxu0 0
    %607 = vmatpush1.bf16.msra.mxu0 %v506
    %608 = vmatprep.subr.bf16.mxu0 0
    %609 = vmatpush1.bf16.msra.mxu0 %v507
    %610 = vmatprep.subr.bf16.mxu0 0
    %611 = vmatpush1.bf16.msra.mxu0 %v508
    %612 = vmatprep.subr.bf16.mxu0 0
    %613 = vmatpush1.bf16.msra.mxu0 %v509
    %614 = vmatprep.subr.bf16.mxu0 0
    %615 = vmatpush1.bf16.msra.mxu0 %v510
    %616 = vmatprep.subr.bf16.mxu0 0
    %617 = vmatpush1.bf16.msra.mxu0 %v511
    %618 = vmatprep.subr.bf16.mxu0 0
    %619 = vmatpush1.bf16.msra.mxu0 %v512
    %620 = vmatprep.subr.bf16.mxu0 0
    %621 = vmatpush1.bf16.msra.mxu0 %v513
    %622 = vmatprep.subr.bf16.mxu0 0
    %623 = vmatpush1.bf16.msra.mxu0 %v514
    %624 = vmatprep.subr.bf16.mxu0 0
    %625 = vmatpush1.bf16.msra.mxu0 %v515
    %626 = vmatprep.subr.bf16.mxu0 0
    %627 = vmatpush1.bf16.msra.mxu0 %v516
    %628 = vmatprep.subr.bf16.mxu0 0
    %629 = vmatpush1.bf16.msra.mxu0 %v517
    %630 = vmatprep.mubr.bf16.mxu0 %v202
    %631 = vmatmul.mubr.bf16.gmra.mrb[0].mxu0 %v201
    %v632 = vpop.f32.mrb[0].mxu0
    %v633 = vadd.f32 %v308, %v632
    %v634 = vpop.f32.mrb[0].mxu0
    %v635 = vpop.f32.mrb[0].mxu0
    %v636 = vpop.f32.mrb[0].mxu0
    %637 = vdwg.mxu0
    %638 = vmatprep.subr.bf16.mxu0 0
    %639 = vmatpush1.bf16.msra.mxu0 %v518
    %640 = vmatprep.subr.bf16.mxu0 0
    %641 = vmatpush1.bf16.msra.mxu0 %v519
    %642 = vmatprep.subr.bf16.mxu0 0
    %643 = vmatpush1.bf16.msra.mxu0 %v520
    %644 = vmatprep.subr.bf16.mxu0 0
    %645 = vmatpush1.bf16.msra.mxu0 %v521
    %646 = vmatprep.subr.bf16.mxu0 0
    %647 = vmatpush1.bf16.msra.mxu0 %v522
    %648 = vmatprep.subr.bf16.mxu0 0
    %649 = vmatpush1.bf16.msra.mxu0 %v523
    %650 = vmatprep.subr.bf16.mxu0 0
    %651 = vmatpush1.bf16.msra.mxu0 %v524
    %652 = vmatprep.subr.bf16.mxu0 0
    %653 = vmatpush1.bf16.msra.mxu0 %v525
    %654 = vmatprep.subr.bf16.mxu0 0
    %655 = vmatpush1.bf16.msra.mxu0 %v526
    %656 = vmatprep.subr.bf16.mxu0 0
    %657 = vmatpush1.bf16.msra.mxu0 %v527
    %658 = vmatprep.subr.bf16.mxu0 0
    %659 = vmatpush1.bf16.msra.mxu0 %v528
    %660 = vmatprep.subr.bf16.mxu0 0
    %661 = vmatpush1.bf16.msra.mxu0 %v529
    %662 = vmatprep.subr.bf16.mxu0 0
    %663 = vmatpush1.bf16.msra.mxu0 %v530
    %664 = vmatprep.subr.bf16.mxu0 0
    %665 = vmatpush1.bf16.msra.mxu0 %v531
    %666 = vmatprep.subr.bf16.mxu0 0
    %667 = vmatpush1.bf16.msra.mxu0 %v532
    %668 = vmatprep.subr.bf16.mxu0 0
    %669 = vmatpush1.bf16.msra.mxu0 %v533
    %670 = vmatprep.mubr.bf16.mxu0 %v204
    %671 = vmatmul.mubr.bf16.gmra.mrb[0].mxu0 %v203
    %v672 = vpop.f32.mrb[0].mxu0
    %v673 = vadd.f32 %v633, %v672
    %v674 = vpop.f32.mrb[0].mxu0
    %v675 = vpop.f32.mrb[0].mxu0
    %v676 = vpop.f32.mrb[0].mxu0
    %677 = vdwg.mxu0
    %678 = vmatprep.subr.bf16.mxu0 0
    %679 = vmatpush1.bf16.msra.mxu0 %v534
    %680 = vmatprep.subr.bf16.mxu0 0
    %681 = vmatpush1.bf16.msra.mxu0 %v535
    %682 = vmatprep.subr.bf16.mxu0 0
    %683 = vmatpush1.bf16.msra.mxu0 %v536
    %684 = vmatprep.subr.bf16.mxu0 0
    %685 = vmatpush1.bf16.msra.mxu0 %v537
    %686 = vmatprep.subr.bf16.mxu0 0
    %687 = vmatpush1.bf16.msra.mxu0 %v538
    %688 = vmatprep.subr.bf16.mxu0 0
    %689 = vmatpush1.bf16.msra.mxu0 %v539
    %690 = vmatprep.subr.bf16.mxu0 0
    %691 = vmatpush1.bf16.msra.mxu0 %v540
    %692 = vmatprep.subr.bf16.mxu0 0
    %693 = vmatpush1.bf16.msra.mxu0 %v541
    %694 = vmatprep.subr.bf16.mxu0 0
    %695 = vmatpush1.bf16.msra.mxu0 %v542
    %696 = vmatprep.subr.bf16.mxu0 0
    %697 = vmatpush1.bf16.msra.mxu0 %v543
    %698 = vmatprep.subr.bf16.mxu0 0
    %699 = vmatpush1.bf16.msra.mxu0 %v544
    %700 = vmatprep.subr.bf16.mxu0 0
    %701 = vmatpush1.bf16.msra.mxu0 %v545
    %702 = vmatprep.subr.bf16.mxu0 0
    %703 = vmatpush1.bf16.msra.mxu0 %v546
    %704 = vmatprep.subr.bf16.mxu0 0
    %705 = vmatpush1.bf16.msra.mxu0 %v547
    %706 = vmatprep.subr.bf16.mxu0 0
    %707 = vmatpush1.bf16.msra.mxu0 %v548
    %708 = vmatprep.subr.bf16.mxu0 0
    %709 = vmatpush1.bf16.msra.mxu0 %v549
    %710 = vmatprep.mubr.bf16.mxu0 %v206
    %711 = vmatmul.mubr.bf16.gmra.mrb[0].mxu0 %v205
    %v712 = vpop.f32.mrb[0].mxu0
    %v713 = vadd.f32 %v673, %v712
    %v714 = vpop.f32.mrb[0].mxu0
    %v715 = vpop.f32.mrb[0].mxu0
    %v716 = vpop.f32.mrb[0].mxu0
    %717 = vdwg.mxu0
    %v718 = vsel %vm78, %v713, -inf
    %719 = vmax.xlane.f32.xlu0 %v718
    %v720 = vpop.xlane.xlu0 %719
    %v721 = vsub.f32 %v713, %v720
    %v722 = vmul.f32 %v721, 1.442695
    %v723 = vpow.pop %v722
    %v724 = vsel %vm78, %v723, 0.0
    %725 = vadd.xlane.f32.xlu0 %v724
    %v726 = vpop.xlane.xlu0 %725
    %v727 = vlog2.pop %v726
    %v728 = vmul.f32 %v727, 0.6931472
    %v729 = vsub.f32 %v721, %v728
    %730 = vst [vmem:[#allocation7] sm:$0x3] %v729
    // Predicated region
    $region22: #{tpu_custom_call.1} parent=1 // pred_check
      _
    $region23: #{tpu_custom_call.1} parent=1 // pred_check_branch
      %732 = sbr.rel (0) target = $region25
    $region24: #{tpu_custom_call.1} parent=1 // pred_region
      %s734 = ssub.s32 32, 32
      %735 = vsyncadd [#allocation4], %s734
      %s737 = sshll.u32 [#allocation7], 4
      %s738 = int_to_ptr.vmem [resolvable:$true] %s737
      %740 = dma.vmem_to_hbm [thread:$0]  %s738, 32, %s3, [#allocation4]
    $region25: #{tpu_custom_call.1} parent=1 // pred_fallthru
      _
    // Predicated region
    $region26: #{tpu_custom_call.1} parent=1 // pred_check
      _
    $region27: #{tpu_custom_call.1} parent=1 // pred_check_branch
      %742 = sbr.rel (0) target = $region29
    $region28: #{tpu_custom_call.1} parent=1 // pred_region
      %743 = dma.done [#allocation4], 32
    $region29: #{tpu_custom_call.1} parent=1 // pred_fallthru
      _
    %744 = vsyncpa [#allocation3], 1
    %745 = vsyncpa [#allocation6], 1
    %746 = vsyncpa [#allocation4], 1

</llo_original>
